<compile_context>
chip_gen: v7x
topology: tpu7x:2x2x1
jax: 0.10.0
libtpu: 0.0.40
codegen_flags: <defaults>
</compile_context>

<pallas_src>
import functools

import jax
import jax.numpy as jnp
from jax.experimental import pallas as pl
from jax.experimental.pallas import tpu as pltpu


def _round_up(x, m):
    return ((x + m - 1) // m) * m


def highway_kernel(x_ref, w_ref, b_ref, o_ref):
    x = x_ref[...]                                     # [TM, D] f32
    d = o_ref.shape[-1]

    # single fused projection: [TM, D] @ [D, 2D]  (bf16 inputs, f32 accum)
    proj = jnp.dot(x.astype(w_ref.dtype), w_ref[...],
                   preferred_element_type=jnp.float32) + b_ref[...]

    n = jnp.maximum(proj[:, :d], 0.0)                  # non-linear branch
    g = jax.nn.sigmoid(proj[:, d:])                    # gate branch (EUP)

    # highway combine:  g*x + (1-g)*n  ==  n + g*(x - n)
    o_ref[...] = (n + g * (x - n)).astype(o_ref.dtype)


def highway_forward(x, w_n, w_g, b_n, b_g, *, block_m=256,
                    compute_dtype=jnp.bfloat16):
    """x: [B, D] f32.  w_n/w_g: [D, D] (in, out).  b_n/b_g: [1, D]."""
    B, D = x.shape

    # Fuse the two projections into one [D, 2D] matmul; bf16 weights halve
    # HBM traffic / VMEM footprint, bias stays f32 (added post-accumulation).
    w_cat = jnp.concatenate([w_n, w_g], axis=1).astype(compute_dtype)   # [D, 2D]
    b_cat = jnp.concatenate([b_n, b_g], axis=1).astype(jnp.float32)     # [1, 2D]

    # Batch tile: multiple of 8 (sublane), capped at block_m.
    tm = min(block_m, _round_up(B, 8))
    grid_m = pl.cdiv(B, tm)
    Bp = grid_m * tm
    x_p = x if Bp == B else jnp.pad(x, ((0, Bp - B), (0, 0)))

    # VMEM budget: double-buffered x/out tiles + resident weights/bias.
    w_bytes = jnp.dtype(compute_dtype).itemsize
    est = (2 * 2 * tm * D * 4                # x + out tiles, double-buffered
           + 2 * (D * 2 * D * w_bytes)       # fused weight (headroom x2)
           + 2 * (2 * D * 4))                # fused bias
    cp_kwargs = dict(dimension_semantics=("parallel",))
    if est > (16 << 20):                     # above the smallest scoped default
        cp_kwargs["vmem_limit_bytes"] = min(int(est * 1.5) + (2 << 20), 64 << 20)

    out_p = pl.pallas_call(
        highway_kernel,
        out_shape=jax.ShapeDtypeStruct((Bp, D), x.dtype),
        grid=(grid_m,),
        in_specs=[
            pl.BlockSpec((tm, D), lambda i: (i, 0)),      # x tile (pipelined)
            pl.BlockSpec((D, 2 * D), lambda i: (0, 0)),   # W_cat (VMEM-resident)
            pl.BlockSpec((1, 2 * D), lambda i: (0, 0)),   # b_cat (VMEM-resident)
        ],
        out_specs=pl.BlockSpec((tm, D), lambda i: (i, 0)),
        compiler_params=pltpu.CompilerParams(**cp_kwargs),
    )(x_p, w_cat, b_cat)

    return out_p[:B] if Bp != B else out_p


def init_highway_params(key, input_dim):
    """Deterministic init mimicking torch.nn.Linear(input_dim, 2*input_dim)
    followed by bias[input_dim:].fill_(1) (gate bias = 1)."""
    k_w, k_b = jax.random.split(key)
    bound = 1.0 / jnp.sqrt(jnp.float32(input_dim))
    # torch weight is [2D, D] with out = x @ W.T + b; rows [:D]=non_lin, [D:]=gate
    w_full = jax.random.uniform(k_w, (2 * input_dim, input_dim),
                                minval=-bound, maxval=bound, dtype=jnp.float32)
    b_full = jax.random.uniform(k_b, (2 * input_dim,),
                                minval=-bound, maxval=bound, dtype=jnp.float32)
    b_full = b_full.at[input_dim:].set(1.0)   # gate bias = 1, as in __init__
    w_n = w_full[:input_dim, :].T             # [D_in, D_out]
    w_g = w_full[input_dim:, :].T             # [D_in, D_out]
    b_n = b_full[:input_dim].reshape(1, input_dim)
    b_g = b_full[input_dim:].reshape(1, input_dim)
    return w_n, w_g, b_n, b_g


def highway_reference(x, w_n, w_g, b_n, b_g):
    n = jnp.maximum(x @ w_n + b_n, 0.0)
    g = jax.nn.sigmoid(x @ w_g + b_g)
    return g * x + (1.0 - g) * n


if __name__ == "__main__":
    batch, input_dim = 8, 128
    key = jax.random.PRNGKey(0)
    k_x, k_p = jax.random.split(key)
    x = jax.random.normal(k_x, (batch, input_dim), dtype=jnp.float32)
    w_n, w_g, b_n, b_g = init_highway_params(k_p, input_dim)

    out = highway_forward(x, w_n, w_g, b_n, b_g)
    out = jax.block_until_ready(out)

    ref = highway_reference(x, w_n, w_g, b_n, b_g)
    assert out.shape == (batch, input_dim)
    # bf16 matmul (f32 accumulation) vs f32 reference -> loosened tolerance.
    assert jnp.allclose(out, ref, atol=2e-2, rtol=2e-2), \
        float(jnp.max(jnp.abs(out - ref)))
    print("KERNEL_OK")
</pallas_src>

<mosaic_0001>
module attributes {stable_mosaic.version = 11 : i64} {
  func.func @highway_kernel(%arg0: i32, %arg1: memref<8x128xf32, #tpu.memory_space<vmem>>, %arg2: memref<128x256xbf16, #tpu.memory_space<vmem>>, %arg3: memref<1x256xf32, #tpu.memory_space<vmem>>, %arg4: memref<8x128xf32, #tpu.memory_space<vmem>>) attributes {dimension_semantics = [#tpu.dimension_semantics<parallel>], iteration_bounds = array<i64: 1>, scalar_prefetch = 0 : i64, scratch_operands = 0 : i64, tpu.core_type = #tpu.core_type<tc>, window_params = [{transform_indices = @transform_0, window_bounds = array<i64: 8, 128>}, {pipeline_mode = #tpu.pipeline_mode<synchronous>, transform_indices = @transform_1, window_bounds = array<i64: 128, 256>}, {pipeline_mode = #tpu.pipeline_mode<synchronous>, transform_indices = @transform_2, window_bounds = array<i64: 1, 256>}, {transform_indices = @transform_3, window_bounds = array<i64: 8, 128>}]} {
    %c0 = arith.constant 0 : index
    %c0_0 = arith.constant 0 : index
    %0 = vector.load %arg1[%c0, %c0_0] : memref<8x128xf32, #tpu.memory_space<vmem>>, vector<8x128xf32>
    %1 = arith.truncf %0 : vector<8x128xf32> to vector<8x128xbf16>
    %c0_1 = arith.constant 0 : index
    %c0_2 = arith.constant 0 : index
    %2 = vector.load %arg2[%c0_1, %c0_2] : memref<128x256xbf16, #tpu.memory_space<vmem>>, vector<128x256xbf16>
    %cst = arith.constant dense<0.000000e+00> : vector<8x256xf32>
    %3 = tpu.matmul %1, %2, %cst {dimension_numbers = #tpu.dot_dimension_numbers<[1], [0], [0], [1], [0, 0, 1, 1], [], []>} : vector<8x128xbf16>, vector<128x256xbf16>, vector<8x256xf32> -> vector<8x256xf32>
    %c0_3 = arith.constant 0 : index
    %c0_4 = arith.constant 0 : index
    %4 = vector.load %arg3[%c0_3, %c0_4] : memref<1x256xf32, #tpu.memory_space<vmem>>, vector<1x256xf32>
    %5 = vector.broadcast %4 : vector<1x256xf32> to vector<8x256xf32>
    %6 = arith.addf %3, %5 : vector<8x256xf32>
    %7 = vector.extract_strided_slice %6 {offsets = [0, 0], sizes = [8, 128], strides = [1, 1]} : vector<8x256xf32> to vector<8x128xf32>
    %cst_5 = arith.constant 0.000000e+00 : f32
    %8 = vector.broadcast %cst_5 : f32 to vector<8x128xf32>
    %9 = arith.maximumf %7, %8 : vector<8x128xf32>
    %10 = vector.extract_strided_slice %6 {offsets = [0, 128], sizes = [8, 128], strides = [1, 1]} : vector<8x256xf32> to vector<8x128xf32>
    %11 = arith.negf %10 : vector<8x128xf32>
    %12 = math.exp %11 : vector<8x128xf32>
    %cst_6 = arith.constant 1.000000e+00 : f32
    %13 = vector.broadcast %cst_6 : f32 to vector<8x128xf32>
    %14 = arith.addf %13, %12 : vector<8x128xf32>
    %15 = arith.divf %13, %14 : vector<8x128xf32>
    %16 = arith.subf %0, %9 : vector<8x128xf32>
    %17 = arith.mulf %15, %16 : vector<8x128xf32>
    %18 = arith.addf %9, %17 : vector<8x128xf32>
    %c0_7 = arith.constant 0 : index
    %c0_8 = arith.constant 0 : index
    %19 = vector.load %arg4[%c0_7, %c0_8] : memref<8x128xf32, #tpu.memory_space<vmem>>, vector<8x128xf32>
    tpu.vector_store %arg4[%c0_7, %c0_8], %18 {strides = array<i32>} : memref<8x128xf32, #tpu.memory_space<vmem>>, vector<8x128xf32>,
    return
  }
  func.func @transform_0(%arg0: i32) -> (i32, i32) {
    %c0_i32 = arith.constant 0 : i32
    %c0_i32_0 = arith.constant 0 : i32
    return %arg0, %c0_i32 : i32, i32
  }
  func.func @transform_1(%arg0: i32) -> (i32, i32) {
    %c0_i32 = arith.constant 0 : i32
    %c0_i32_0 = arith.constant 0 : i32
    %c0_i32_1 = arith.constant 0 : i32
    return %c0_i32, %c0_i32_0 : i32, i32
  }
  func.func @transform_2(%arg0: i32) -> (i32, i32) {
    %c0_i32 = arith.constant 0 : i32
    %c0_i32_0 = arith.constant 0 : i32
    %c0_i32_1 = arith.constant 0 : i32
    return %c0_i32, %c0_i32_0 : i32, i32
  }
  func.func @transform_3(%arg0: i32) -> (i32, i32) {
    %c0_i32 = arith.constant 0 : i32
    %c0_i32_0 = arith.constant 0 : i32
    return %arg0, %c0_i32 : i32, i32
  }
}

</mosaic_0001>

<llo_original>
// kernel: tpu_custom_call.1
$region0: #{tpu_custom_call.1}
  #allocation0 [shape = 'u32[]', space=smem, size = 0x4, offset = 0x4, fixed_abs, tag = 'smem constant byte address 0x4 - core index']
  #allocation1 [shape = 'u32[144,128]{1,0:T(1,128)}', space=vmem, size = 0x12000, scoped, tag = 'internal scratch']
  %s0 = inlined_call_operand.hbm [shape: f32[8,128], index: 0, kind: input, shape index: {}]
  %s1 = inlined_call_operand.hbm [shape: bf16[128,256], index: 1, kind: input, shape index: {}]
  %s2 = inlined_call_operand.vmem [shape: f32[1,256], index: 2, kind: input, shape index: {}]
  %s3 = inlined_call_operand.hbm [shape: f32[8,128], index: 3, kind: output, shape index: {}]
  %s4 = sld [smem:[#allocation0]]
  $region30: #{tpu_custom_call.1} parent=0
    _
  %s6 = ssub.s32 1, %s4
  %s7 = scalar_select 0, %s6, %s4
  $region1: #{tpu_custom_call.1} parent=0
    #allocation2 [shape = 'u8[4096]{0}', space=vmem, size = 0x1000, scoped, tag = 'input window, operand 0, single buffered']
    #allocation3 [shape = 's32[1]{0}', space=sflag, size = 0x4, scoped, tag = 'scoped memory for tpu_custom_call.1']
    #allocation4 [shape = 's32[1]{0}', space=sflag, size = 0x4, scoped, tag = 'scoped memory for tpu_custom_call.1']
    #allocation5 [shape = 'u8[65536]{0}', space=vmem, size = 0x10000, scoped, tag = 'input window, operand 1, single buffered']
    #allocation6 [shape = 's32[1]{0}', space=sflag, size = 0x4, scoped, tag = 'scoped memory for tpu_custom_call.1']
    #allocation7 [shape = 'u8[4096]{0}', space=vmem, size = 0x1000, scoped, tag = 'output window, operand 0, single buffered']
    %8 = vsyncpa [#allocation3], 0
    %9 = vsyncpa [#allocation6], 0
    %10 = vsyncpa [#allocation4], 0
    // Predicated region
    $region2: #{tpu_custom_call.1} parent=1 // pred_check
      _
    $region3: #{tpu_custom_call.1} parent=1 // pred_check_branch
      %12 = sbr.rel (0) target = $region5
    $region4: #{tpu_custom_call.1} parent=1 // pred_region
      %s14 = ssub.s32 128, 128
      %15 = vsyncadd [#allocation3], %s14
      %s17 = sshll.u32 [#allocation2], 4
      %s18 = int_to_ptr.vmem [resolvable:$true] %s17
      %20 = dma.hbm_to_vmem [thread:$0]  %s0, 128, %s18, [#allocation3]
    $region5: #{tpu_custom_call.1} parent=1 // pred_fallthru
      _
    // Predicated region
    $region6: #{tpu_custom_call.1} parent=1 // pred_check
      _
    $region7: #{tpu_custom_call.1} parent=1 // pred_check_branch
      %22 = sbr.rel (0) target = $region9
    $region8: #{tpu_custom_call.1} parent=1 // pred_region
      %s24 = ssub.s32 2048, 2048
      %25 = vsyncadd [#allocation6], %s24
      %s26 = sshll.u32 [#allocation5], 4
      %s27 = int_to_ptr.vmem [resolvable:$true] %s26
      %32 = dma.hbm_to_vmem [thread:$0]  %s1, 2048, %s27, [#allocation6], 128, 128, 8
    $region9: #{tpu_custom_call.1} parent=1 // pred_fallthru
      _
    // Predicated region
    $region10: #{tpu_custom_call.1} parent=1 // pred_check
      _
    $region11: #{tpu_custom_call.1} parent=1 // pred_check_branch
      %34 = sbr.rel (0) target = $region13
    $region12: #{tpu_custom_call.1} parent=1 // pred_region
      _
    $region13: #{tpu_custom_call.1} parent=1 // pred_fallthru
      _
    // Predicated region
    $region14: #{tpu_custom_call.1} parent=1 // pred_check
      _
    $region15: #{tpu_custom_call.1} parent=1 // pred_check_branch
      %36 = sbr.rel (0) target = $region17
    $region16: #{tpu_custom_call.1} parent=1 // pred_region
      %37 = dma.done [#allocation3], 128
    $region17: #{tpu_custom_call.1} parent=1 // pred_fallthru
      _
    // Predicated region
    $region18: #{tpu_custom_call.1} parent=1 // pred_check
      _
    $region19: #{tpu_custom_call.1} parent=1 // pred_check_branch
      %39 = sbr.rel (0) target = $region21
    $region20: #{tpu_custom_call.1} parent=1 // pred_region
      %40 = dma.done [#allocation6], 2048
    $region21: #{tpu_custom_call.1} parent=1 // pred_fallthru
      _
    %v42 = vld [vmem:[#allocation2] sm:$0xff]
    %v43 = vpack.c.bf16 %v42, %v42
    %v44 = vld [vmem:[#allocation5] sm:$0xff]
    %v45 = vld [vmem:[#allocation5 + $0x8] sm:$0xff]
    %v46 = vld [vmem:[#allocation5 + $0x10] sm:$0xff]
    %v47 = vld [vmem:[#allocation5 + $0x18] sm:$0xff]
    %v48 = vld [vmem:[#allocation5 + $0x20] sm:$0xff]
    %v49 = vld [vmem:[#allocation5 + $0x28] sm:$0xff]
    %v50 = vld [vmem:[#allocation5 + $0x30] sm:$0xff]
    %v51 = vld [vmem:[#allocation5 + $0x38] sm:$0xff]
    %v52 = vld [vmem:[#allocation5 + $0x40] sm:$0xff]
    %v53 = vld [vmem:[#allocation5 + $0x48] sm:$0xff]
    %v54 = vld [vmem:[#allocation5 + $0x50] sm:$0xff]
    %v55 = vld [vmem:[#allocation5 + $0x58] sm:$0xff]
    %v56 = vld [vmem:[#allocation5 + $0x60] sm:$0xff]
    %v57 = vld [vmem:[#allocation5 + $0x68] sm:$0xff]
    %v58 = vld [vmem:[#allocation5 + $0x70] sm:$0xff]
    %v59 = vld [vmem:[#allocation5 + $0x78] sm:$0xff]
    %v60 = vld [vmem:[%s2] sm:$0x3]
    %v62 = vlaneseq
    %v63 = vshrl.u32 %v62, 7
    %v64 = vsub.s32 0, %v63
    %v65 = vrot.slane %v60, %v64
    %v66 = vlaneseq
    %v67 = vshrl.u32 %v66, 7
    %v68 = vsub.s32 1, %v67
    %v69 = vrot.slane %v60, %v68
    %v88 = vunpack.c.l.b16 %v44
    %v89 = vunpack.c.h.b16 %v44
    %v90 = vunpack.c.l.b16 %v45
    %v91 = vunpack.c.h.b16 %v45
    %v92 = vunpack.c.l.b16 %v46
    %v93 = vunpack.c.h.b16 %v46
    %v94 = vunpack.c.l.b16 %v47
    %v95 = vunpack.c.h.b16 %v47
    %v96 = vunpack.c.l.b16 %v48
    %v97 = vunpack.c.h.b16 %v48
    %v98 = vunpack.c.l.b16 %v49
    %v99 = vunpack.c.h.b16 %v49
    %v100 = vunpack.c.l.b16 %v50
    %v101 = vunpack.c.h.b16 %v50
    %v102 = vunpack.c.l.b16 %v51
    %v103 = vunpack.c.h.b16 %v51
    %v104 = vunpack.c.l.b16 %v52
    %v105 = vunpack.c.h.b16 %v52
    %v106 = vunpack.c.l.b16 %v53
    %v107 = vunpack.c.h.b16 %v53
    %v108 = vunpack.c.l.b16 %v54
    %v109 = vunpack.c.h.b16 %v54
    %v110 = vunpack.c.l.b16 %v55
    %v111 = vunpack.c.h.b16 %v55
    %v112 = vunpack.c.l.b16 %v56
    %v113 = vunpack.c.h.b16 %v56
    %v114 = vunpack.c.l.b16 %v57
    %v115 = vunpack.c.h.b16 %v57
    %v116 = vunpack.c.l.b16 %v58
    %v117 = vunpack.c.h.b16 %v58
    %v118 = vunpack.c.l.b16 %v59
    %v119 = vunpack.c.h.b16 %v59
    %v120 = vpack.c.b16 %v90, %v88
    %v121 = vpack.c.b16 %v91, %v89
    %v122 = vpack.c.b16 %v94, %v92
    %v123 = vpack.c.b16 %v95, %v93
    %v124 = vpack.c.b16 %v98, %v96
    %v125 = vpack.c.b16 %v99, %v97
    %v126 = vpack.c.b16 %v102, %v100
    %v127 = vpack.c.b16 %v103, %v101
    %v128 = vpack.c.b16 %v106, %v104
    %v129 = vpack.c.b16 %v107, %v105
    %v130 = vpack.c.b16 %v110, %v108
    %v131 = vpack.c.b16 %v111, %v109
    %v132 = vpack.c.b16 %v114, %v112
    %v133 = vpack.c.b16 %v115, %v113
    %v134 = vpack.c.b16 %v118, %v116
    %v135 = vpack.c.b16 %v119, %v117
    %152 = vmatprep.subr.bf16.mxu0 %v121
    %153 = vmatpush1.bf16.msra.mxu0 %v120
    %154 = vmatprep.subr.bf16.mxu0 %v123
    %155 = vmatpush1.bf16.msra.mxu0 %v122
    %156 = vmatprep.subr.bf16.mxu0 %v125
    %157 = vmatpush1.bf16.msra.mxu0 %v124
    %158 = vmatprep.subr.bf16.mxu0 %v127
    %159 = vmatpush1.bf16.msra.mxu0 %v126
    %160 = vmatprep.subr.bf16.mxu0 %v129
    %161 = vmatpush1.bf16.msra.mxu0 %v128
    %162 = vmatprep.subr.bf16.mxu0 %v131
    %163 = vmatpush1.bf16.msra.mxu0 %v130
    %164 = vmatprep.subr.bf16.mxu0 %v133
    %165 = vmatpush1.bf16.msra.mxu0 %v132
    %166 = vmatprep.subr.bf16.mxu0 %v135
    %167 = vmatpush1.bf16.msra.mxu0 %v134
    %168 = vmatprep.subr.bf16.mxu0 0
    %169 = vmatpush1.bf16.msra.mxu0 0
    %170 = vmatprep.subr.bf16.mxu0 0
    %171 = vmatpush1.bf16.msra.mxu0 0
    %172 = vmatprep.subr.bf16.mxu0 0
    %173 = vmatpush1.bf16.msra.mxu0 0
    %174 = vmatprep.subr.bf16.mxu0 0
    %175 = vmatpush1.bf16.msra.mxu0 0
    %176 = vmatprep.subr.bf16.mxu0 0
    %177 = vmatpush1.bf16.msra.mxu0 0
    %178 = vmatprep.subr.bf16.mxu0 0
    %179 = vmatpush1.bf16.msra.mxu0 0
    %180 = vmatprep.subr.bf16.mxu0 0
    %181 = vmatpush1.bf16.msra.mxu0 0
    %182 = vmatprep.subr.bf16.mxu0 0
    %183 = vmatpush1.bf16.msra.mxu0 0
    %184 = vmatprep.mubr.bf16.mxu0 0
    %185 = vmatmul.mubr.bf16.gmra.mrb[0].mxu0 %v43
    %v186 = vpop.f32.mrb[0].mxu0
    %v187 = vadd.f32 %v65, %v186
    %v188 = vpop.f32.mrb[0].mxu0
    %v189 = vadd.f32 %v69, %v188
    %v190 = vpop.f32.mrb[0].mxu0
    %v191 = vpop.f32.mrb[0].mxu0
    %192 = vdwg.mxu0
    %v193 = vmax.f32 %v187, 0.0
    %v194 = vxor.u32 %v189, 2147483648
    %v195 = vmul.f32 %v194, 1.442695
    %v196 = vpow.pop %v195
    %v197 = vadd.f32 %v196, 1.0
    %v198 = vrcp.pop %v197
    %v199 = vmul.f32 1.0, %v198
    %v200 = vsub.f32 %v42, %v193
    %v201 = vmul.f32 %v199, %v200
    %v202 = vadd.f32 %v193, %v201
    %203 = vst [vmem:[#allocation7] sm:$0xff] %v202
    // Predicated region
    $region22: #{tpu_custom_call.1} parent=1 // pred_check
      _
    $region23: #{tpu_custom_call.1} parent=1 // pred_check_branch
      %205 = sbr.rel (0) target = $region25
    $region24: #{tpu_custom_call.1} parent=1 // pred_region
      %s207 = ssub.s32 128, 128
      %208 = vsyncadd [#allocation4], %s207
      %s210 = sshll.u32 [#allocation7], 4
      %s211 = int_to_ptr.vmem [resolvable:$true] %s210
      %213 = dma.vmem_to_hbm [thread:$0]  %s211, 128, %s3, [#allocation4]
    $region25: #{tpu_custom_call.1} parent=1 // pred_fallthru
      _
    // Predicated region
    $region26: #{tpu_custom_call.1} parent=1 // pred_check
      _
    $region27: #{tpu_custom_call.1} parent=1 // pred_check_branch
      %215 = sbr.rel (0) target = $region29
    $region28: #{tpu_custom_call.1} parent=1 // pred_region
      %216 = dma.done [#allocation4], 128
    $region29: #{tpu_custom_call.1} parent=1 // pred_fallthru
      _
    %217 = vsyncpa [#allocation3], 1
    %218 = vsyncpa [#allocation6], 1
    %219 = vsyncpa [#allocation4], 1

</llo_original>
